<compile_context>
chip_gen: v6e
topology: v6e:2x2x1
jax: 0.10.0
libtpu: 0.0.40
codegen_flags: <defaults>
</compile_context>

<pallas_src>
import jax
import jax.numpy as jnp
from jax.experimental import pallas as pl
from jax.experimental.pallas import tpu as pltpu

_LANES = 128
_SUBLANES = 8
_TINY_ELEMS = _SUBLANES * _LANES  # below this, pallas_call is pure overhead


def _mlp_kernel(params_ref, x_ref, o_ref):
    # params_ref lives in SMEM: [w0, b0, w1, b1] as scalars.
    w0 = params_ref[0]
    b0 = params_ref[1]
    w1 = params_ref[2]
    b1 = params_ref[3]
    x = x_ref[...]                        # [tile_rows, 128] f32, lane-dense
    h = jnp.maximum(x * w0 + b0, 0.0)     # hidden0 + relu0 (VPU)
    y = jnp.maximum(h * w1 + b1, 0.0)     # hidden1 + relu1 (VPU)
    o_ref[...] = y.astype(o_ref.dtype)


def _choose_tile_rows(rows, block_rows):
    """Pick a row-tile size: multiple of 8, <= block_rows, and >=2 tiles when
    possible so v7x's two TensorCores both get work on mid-sized batches."""
    if rows <= _SUBLANES:
        return rows                        # single full-array block
    half = pl.cdiv(rows, 2)
    half = ((half + _SUBLANES - 1) // _SUBLANES) * _SUBLANES  # round up to 8
    return min(half, block_rows)


def _run_kernel_2d(x2d, params, block_rows):
    """x2d: [rows, 128] f32 (zero-copy view of the flat input)."""
    rows = x2d.shape[0]
    tile_rows = _choose_tile_rows(rows, block_rows)
    n_tiles = pl.cdiv(rows, tile_rows)     # last tile may be partial (masked)

    n_elems = rows * _LANES
    tile_bytes = tile_rows * _LANES * 4
    # in + out, double-buffered, plus small headroom; within every chip's VMEM.
    vmem_limit = max(4 * tile_bytes + (2 << 20), 16 << 20)

    return pl.pallas_call(
        _mlp_kernel,
        out_shape=jax.ShapeDtypeStruct((rows, _LANES), jnp.float32),
        grid_spec=pltpu.PrefetchScalarGridSpec(
            num_scalar_prefetch=1,
            grid=(n_tiles,),
            in_specs=[
                pl.BlockSpec((tile_rows, _LANES), lambda i, params: (i, 0)),
            ],
            out_specs=pl.BlockSpec((tile_rows, _LANES), lambda i, params: (i, 0)),
        ),
        compiler_params=pltpu.CompilerParams(
            dimension_semantics=("parallel",),   # shards tiles across TCs on v7x
            vmem_limit_bytes=int(vmem_limit),
        ),
        cost_estimate=pl.CostEstimate(
            flops=6 * n_elems, bytes_accessed=8 * n_elems, transcendentals=0,
        ),
    )(params, x2d)


def f_prime_model_forward(x, w0, b0, w1, b1, *, block_rows=4096):
    """Forward pass of f_prime_model.

    x: [..., 1] (any batch shape with a trailing feature dim of 1), float32.
    w0, w1: [1, 1] torch-style [out_features, in_features] weights.
    b0, b1: [1] biases.
    Returns an array of the same shape as x.
    """
    x = jnp.asarray(x, jnp.float32)
    orig_shape = x.shape
    n_elems = int(x.size)

    w0s = jnp.asarray(w0, jnp.float32).reshape(-1)[0]
    b0s = jnp.asarray(b0, jnp.float32).reshape(-1)[0]
    w1s = jnp.asarray(w1, jnp.float32).reshape(-1)[0]
    b1s = jnp.asarray(b1, jnp.float32).reshape(-1)[0]

    # Tiny inputs (incl. the canonical [1,1]): a fused XLA elementwise op is
    # strictly cheaper than any kernel launch + DMA.
    if n_elems < _TINY_ELEMS:
        return jnp.maximum(w1s * jnp.maximum(w0s * x + b0s, 0.0) + b1s, 0.0)

    # Pack params once; scalar-prefetch lands them in SMEM (one tiny DMA).
    params = jnp.stack([w0s, b0s, w1s, b1s])

    x_flat = x.reshape(-1)
    rem = n_elems % _LANES

    if rem == 0:
        # Zero-copy path: free reshape in, free reshape out, no pad/slice.
        rows = n_elems // _LANES
        y2d = _run_kernel_2d(x_flat.reshape(rows, _LANES), params, block_rows)
        return y2d.reshape(orig_shape)

    # Ragged path: kernel on the 128-aligned bulk, tiny XLA op on the tail.
    bulk = n_elems - rem
    rows = bulk // _LANES
    y_bulk = _run_kernel_2d(x_flat[:bulk].reshape(rows, _LANES), params, block_rows)
    x_tail = x_flat[bulk:]
    y_tail = jnp.maximum(w1s * jnp.maximum(w0s * x_tail + b0s, 0.0) + b1s, 0.0)
    return jnp.concatenate([y_bulk.reshape(-1), y_tail]).reshape(orig_shape)


def _reference(x, w0, b0, w1, b1):
    # torch.nn.Linear semantics: y = x @ W.T + b
    h = jnp.maximum(x @ w0.T + b0, 0.0)
    return jnp.maximum(h @ w1.T + b1, 0.0)


if __name__ == "__main__":
    key = jax.random.PRNGKey(0)
    k_w0, k_b0, k_w1, k_b1, k_x1, k_x2 = jax.random.split(key, 6)

    # Deterministic torch.nn.Linear(1,1)-shaped params (fan_in=1 -> bound=1).
    w0 = jax.random.uniform(k_w0, (1, 1), jnp.float32, -1.0, 1.0)  # [out, in]
    b0 = jax.random.uniform(k_b0, (1,), jnp.float32, -1.0, 1.0)    # [out]
    w1 = jax.random.uniform(k_w1, (1, 1), jnp.float32, -1.0, 1.0)
    b1 = jax.random.uniform(k_b1, (1,), jnp.float32, -1.0, 1.0)

    # Canonical module input (tiny fast path) ...
    x_canonical = jnp.array([[2.0]], dtype=jnp.float32)              # [1, 1]
    # ... a lane-aligned batch (zero-copy kernel path, multi-tile) ...
    x_aligned = jax.random.normal(k_x1, (4096, 1), dtype=jnp.float32)
    # ... and a ragged batch (kernel on bulk + masked partial tile + tail).
    x_ragged = jax.random.normal(k_x2, (2000, 1), dtype=jnp.float32)

    outs = []
    for xin in (x_canonical, x_aligned, x_ragged):
        y = jax.block_until_ready(f_prime_model_forward(xin, w0, b0, w1, b1))
        r = _reference(xin, w0, b0, w1, b1)
        assert y.shape == r.shape, (y.shape, r.shape)
        assert jnp.allclose(y, r, atol=1e-6), (xin.shape, float(jnp.abs(y - r).max()))
        outs.append(y)

    print("KERNEL_OK")
</pallas_src>

<mosaic_0001>
module attributes {stable_mosaic.version = 11 : i64} {
  func.func @_mlp_kernel(%arg0: i32, %arg1: memref<4xf32, #tpu.memory_space<smem>>, %arg2: memref<16x128xf32, #tpu.memory_space<vmem>>, %arg3: memref<16x128xf32, #tpu.memory_space<vmem>>) attributes {dimension_semantics = [#tpu.dimension_semantics<parallel>], iteration_bounds = array<i64: 2>, scalar_prefetch = 1 : i64, scratch_operands = 0 : i64, tpu.core_type = #tpu.core_type<tc>, window_params = [{transform_indices = @transform_0, window_bounds = array<i64: 16, 128>}, {transform_indices = @transform_1, window_bounds = array<i64: 16, 128>}]} {
    %c0 = arith.constant 0 : index
    %0 = memref.load %arg1[%c0] : memref<4xf32, #tpu.memory_space<smem>>
    %c1 = arith.constant 1 : index
    %1 = memref.load %arg1[%c1] : memref<4xf32, #tpu.memory_space<smem>>
    %c2 = arith.constant 2 : index
    %2 = memref.load %arg1[%c2] : memref<4xf32, #tpu.memory_space<smem>>
    %c3 = arith.constant 3 : index
    %3 = memref.load %arg1[%c3] : memref<4xf32, #tpu.memory_space<smem>>
    %c0_0 = arith.constant 0 : index
    %c0_1 = arith.constant 0 : index
    %4 = vector.load %arg2[%c0_0, %c0_1] : memref<16x128xf32, #tpu.memory_space<vmem>>, vector<16x128xf32>
    %5 = vector.broadcast %0 : f32 to vector<16x128xf32>
    %6 = arith.mulf %4, %5 : vector<16x128xf32>
    %7 = vector.broadcast %1 : f32 to vector<16x128xf32>
    %8 = arith.addf %6, %7 : vector<16x128xf32>
    %cst = arith.constant 0.000000e+00 : f32
    %9 = vector.broadcast %cst : f32 to vector<16x128xf32>
    %10 = arith.maximumf %8, %9 : vector<16x128xf32>
    %11 = vector.broadcast %2 : f32 to vector<16x128xf32>
    %12 = arith.mulf %10, %11 : vector<16x128xf32>
    %13 = vector.broadcast %3 : f32 to vector<16x128xf32>
    %14 = arith.addf %12, %13 : vector<16x128xf32>
    %cst_2 = arith.constant 0.000000e+00 : f32
    %15 = vector.broadcast %cst_2 : f32 to vector<16x128xf32>
    %16 = arith.maximumf %14, %15 : vector<16x128xf32>
    %c0_3 = arith.constant 0 : index
    %c0_4 = arith.constant 0 : index
    %17 = vector.load %arg3[%c0_3, %c0_4] : memref<16x128xf32, #tpu.memory_space<vmem>>, vector<16x128xf32>
    tpu.vector_store %arg3[%c0_3, %c0_4], %16 {strides = array<i32>} : memref<16x128xf32, #tpu.memory_space<vmem>>, vector<16x128xf32>,
    return
  }
  func.func @transform_0(%arg0: i32, %arg1: memref<4xf32, #tpu.memory_space<smem>>) -> (i32, i32) {
    %c0_i32 = arith.constant 0 : i32
    %c0_i32_0 = arith.constant 0 : i32
    return %arg0, %c0_i32 : i32, i32
  }
  func.func @transform_1(%arg0: i32, %arg1: memref<4xf32, #tpu.memory_space<smem>>) -> (i32, i32) {
    %c0_i32 = arith.constant 0 : i32
    %c0_i32_0 = arith.constant 0 : i32
    return %arg0, %c0_i32 : i32, i32
  }
}

</mosaic_0001>

<llo_original>
// kernel: tpu_custom_call.1
$region0: #{tpu_custom_call.1}
  #allocation0 [shape = 'u32[]', space=smem, size = 0x4, offset = 0x4, fixed_abs, tag = 'smem constant byte address 0x4 - core index']
  #allocation1 [shape = 'u32[144,128]{1,0:T(1,128)}', space=vmem, size = 0x12000, scoped, tag = 'internal scratch']
  #allocation2 [shape = 's32[1]{0}', space=sflag, size = 0x4, scoped, tag = 'scoped memory for tpu_custom_call.1']
  #allocation3 [shape = 'u8[512]{0}', space=smem, size = 0x200, scoped, tag = 'prefetched SMEM operand 0']
  %s0 = inlined_call_operand.hbm [shape: f32[4], index: 0, kind: input, shape index: {}]
  %s1 = inlined_call_operand.hbm [shape: f32[32,128], index: 1, kind: input, shape index: {}]
  %s2 = inlined_call_operand.hbm [shape: f32[32,128], index: 2, kind: output, shape index: {}]
  %s3 = sld [smem:[#allocation0]]
  $region41: #{tpu_custom_call.1} parent=0
    _
  %s5 = ssub.s32 1, %s3
  %s6 = scalar_select 0, %s5, %s3
  %8 = dma.hbm_to_smem %s0, 16, [#allocation3], [#allocation2]
  %9 = dma.done [#allocation2], 16
  %10 = sfence
  $region1: #{tpu_custom_call.1} parent=0
    #allocation4 [shape = 'u8[16384]{0}', space=vmem, size = 0x4000, scoped, tag = 'input window, operand 1']
    #allocation5 [shape = 's32[2]{0}', space=sflag, size = 0x8, scoped, tag = 'scoped memory for tpu_custom_call.1']
    #allocation6 [shape = 's32[2]{0}', space=sflag, size = 0x8, scoped, tag = 'scoped memory for tpu_custom_call.1']
    #allocation7 [shape = 'u8[16384]{0}', space=vmem, size = 0x4000, scoped, tag = 'output window, operand 0']
    %11 = vsyncpa [#allocation5], 0
    %s12 = scalar_lea.sflag [#allocation5], 1
    %13 = vsyncpa %s12, 0
    %14 = vsyncpa [#allocation6], 0
    %s15 = scalar_lea.sflag [#allocation6], 1
    %16 = vsyncpa %s15, 0
    loop: start=0, step=1, limit=4
    $region2: #{tpu_custom_call.1} parent=1 // loop_pre_header
      _
    $region3: #{tpu_custom_call.1} parent=1 // loop_header
      %s18 = sphi 0, %s22
      %p19 = scmp.ge.s32.totalorder %s18, 4
      %s28 = sphi 0, %s30
      %s31 = sphi 0, %s28
      %s32 = sphi 0, %s31
      %s48 = sphi 0, %s32
      %s54 = sphi 0, %s56
      %s57 = sphi 0, %s54
      %s58 = sphi 0, %s57
      %s74 = sphi 0, %s58
    $region4: #{tpu_custom_call.1} parent=1 // loop_header_branch
      %21 = sbr.rel (%p19) target = $region8
    $region5: #{tpu_custom_call.1} parent=1 // loop_body
      %s23 = ssub.s32 %s18, 1
      %s24 = ssub.s32 %s18, 2
      %s25 = sadd.s32 %s18, 1
      %s26 = ssub.s32 %s18, %s25
      %p27 = scmp.eq.s32.totalorder %s26, 0
      %s29 = sadd.s32 %s28, 1
      %s30 = scalar_select %p27, %s28, %s29
      %p33 = pneg %p27
      %p34 = scmp.eq.s32.totalorder %s18, 1
      %p35 = por %p33, %p34
      %p36 = scmp.ne.s32.totalorder %s28, %s31
      %p37 = scmp.eq.s32.totalorder %s18, 0
      %p38 = por %p36, %p37
      %p39 = scmp.ne.s32.totalorder %s28, %s31
      %p40 = scmp.eq.s32.totalorder %s23, 1
      %p41 = por %p39, %p40
      %p42 = scmp.ne.s32.totalorder %s31, %s32
      %p43 = scmp.eq.s32.totalorder %s23, 0
      %p44 = por %p42, %p43
      %p45 = scmp.ne.s32.totalorder %s31, %s32
      %p46 = scmp.eq.s32.totalorder %s24, 1
      %p47 = por %p45, %p46
      %p49 = scmp.ne.s32.totalorder %s32, %s48
      %p50 = scmp.eq.s32.totalorder %s24, 0
      %p51 = por %p49, %p50
      %s52 = ssub.s32 %s18, %s25
      %p53 = scmp.eq.s32.totalorder %s52, 0
      %s55 = sadd.s32 %s54, 1
      %s56 = scalar_select %p53, %s54, %s55
      %p59 = pneg %p53
      %p60 = scmp.eq.s32.totalorder %s18, 1
      %p61 = por %p59, %p60
      %p62 = scmp.ne.s32.totalorder %s54, %s57
      %p63 = scmp.eq.s32.totalorder %s18, 0
      %p64 = por %p62, %p63
      %p65 = scmp.ne.s32.totalorder %s54, %s57
      %p66 = scmp.eq.s32.totalorder %s23, 1
      %p67 = por %p65, %p66
      %p68 = scmp.ne.s32.totalorder %s57, %s58
      %p69 = scmp.eq.s32.totalorder %s23, 0
      %p70 = por %p68, %p69
      %p71 = scmp.ne.s32.totalorder %s57, %s58
      %p72 = scmp.eq.s32.totalorder %s24, 1
      %p73 = por %p71, %p72
      %p75 = scmp.ne.s32.totalorder %s58, %s74
      %p76 = scmp.eq.s32.totalorder %s24, 0
      %p77 = por %p75, %p76
      %p78 = scmp.le.s32.totalorder 1, %s18
      %p79 = scmp.lt.s32.totalorder %s18, 3
      %p80 = pnand %p78, %p79
      %p81 = pneg %p80
      // Predicated region
      $region9: #{tpu_custom_call.1} parent=5 // pred_check
        _
      $region10: #{tpu_custom_call.1} parent=5 // pred_check_branch
        %83 = sbr.rel (%p80) target = $region12
      $region11: #{tpu_custom_call.1} parent=5 // pred_region
        %s84 = ssub.s32 %s18, 1
      $region12: #{tpu_custom_call.1} parent=5 // pred_fallthru
        _
      %p85 = scmp.lt.s32.totalorder %s18, 2
      // Predicated region
      $region13: #{tpu_custom_call.1} parent=5 // pred_check
        %p86 = pneg %p85
      $region14: #{tpu_custom_call.1} parent=5 // pred_check_branch
        %88 = sbr.rel (%p86) target = $region16
      $region15: #{tpu_custom_call.1} parent=5 // pred_region
        // Predicated region
        $region17: #{tpu_custom_call.1} parent=15 // pred_check
          %p89 = pneg %p38
        $region18: #{tpu_custom_call.1} parent=15 // pred_check_branch
          %91 = sbr.rel (%p89) target = $region20
        $region19: #{tpu_custom_call.1} parent=15 // pred_region
          %s92 = sand.u32 %s28, 1
          %s93 = scalar_lea.sflag [#allocation5], %s92
          %s94 = sand.u32 %s28, 1
          %s95 = smul.addr %s94, 16
          %s96 = scalar_lea.vmem [#allocation4], %s95
          %s97 = smul.u32 2, %s18
          %s99 = ssub.s32 256, 256
          %100 = vsyncadd %s93, %s99
          %s101 = smul.addr %s97, 128
          %s102 = scalar_lea.hbm %s1, %s101
          %s103 = sshll.u32 %s96, 4
          %s104 = int_to_ptr.vmem [resolvable:$true] %s103
          %109 = dma.hbm_to_vmem [thread:$0]  %s102, 256, %s104, %s93, 128, 128, 8
        $region20: #{tpu_custom_call.1} parent=15 // pred_fallthru
          _
      $region16: #{tpu_custom_call.1} parent=5 // pred_fallthru
        _
      %p110 = scmp.le.s32.totalorder 1, %s18
      %p111 = scmp.lt.s32.totalorder %s18, 3
      %p112 = pnand %p110, %p111
      %p113 = pneg %p112
      // Predicated region
      $region21: #{tpu_custom_call.1} parent=5 // pred_check
        _
      $region22: #{tpu_custom_call.1} parent=5 // pred_check_branch
        %115 = sbr.rel (%p112) target = $region24
      $region23: #{tpu_custom_call.1} parent=5 // pred_region
        %s116 = ssub.s32 %s18, 1
        %s117 = sand.u32 %s31, 1
        %s118 = scalar_lea.sflag [#allocation5], %s117
        %s119 = sand.u32 %s31, 1
        %s120 = smul.addr %s119, 16
        %s121 = scalar_lea.vmem [#allocation4], %s120
        // Predicated region
        $region25: #{tpu_custom_call.1} parent=23 // pred_check
          %p122 = pneg %p44
        $region26: #{tpu_custom_call.1} parent=23 // pred_check_branch
          %124 = sbr.rel (%p122) target = $region28
        $region27: #{tpu_custom_call.1} parent=23 // pred_region
          %125 = dma.done %s118, 256
        $region28: #{tpu_custom_call.1} parent=23 // pred_fallthru
          _
        %s126 = sand.u32 %s31, 1
        %s127 = scalar_lea.sflag [#allocation5], %s126
        %s128 = sand.u32 %s31, 1
        %s129 = smul.addr %s128, 16
        %s130 = scalar_lea.vmem [#allocation4], %s129
        %p131 = pneg %p44
        %p132 = pneg %p41
        %p133 = pneg %p70
        %p134 = pneg %p67
        %s135 = sand.u32 %s57, 1
        %s136 = scalar_lea.sflag [#allocation6], %s135
        %s137 = sand.u32 %s57, 1
        %s138 = smul.addr %s137, 16
        %s139 = scalar_lea.vmem [#allocation7], %s138
        %s140 = smul.u32 2, %s23
        %s141 = smul.u32 2, %s23
        %s142 = sld [smem:[#allocation3]]
        %s143 = sld [smem:[#allocation3 + $0x1]]
        %s144 = sld [smem:[#allocation3 + $0x2]]
        %s145 = sld [smem:[#allocation3 + $0x3]]
        %v146 = vld [vmem:[%s121] sm:$0xff]
        %v147 = vld [vmem:[%s121 + $0x8] sm:$0xff]
        %v148 = vstv %s142
        %v149 = vmul.f32 %v146, %v148
        %v150 = vmul.f32 %v147, %v148
        %v151 = vstv %s143
        %v152 = vadd.f32 %v149, %v151
        %v153 = vadd.f32 %v150, %v151
        %v154 = vmax.f32 %v152, 0.0
        %v155 = vmax.f32 %v153, 0.0
        %v156 = vstv %s144
        %v157 = vmul.f32 %v154, %v156
        %v158 = vmul.f32 %v155, %v156
        %v159 = vstv %s145
        %v160 = vadd.f32 %v157, %v159
        %v161 = vadd.f32 %v158, %v159
        %v162 = vmax.f32 %v160, 0.0
        %v163 = vmax.f32 %v161, 0.0
        %164 = vst [vmem:[%s139] sm:$0xff] %v162
        %165 = vst [vmem:[%s139 + $0x8] sm:$0xff] %v163
        %s166 = sand.u32 %s57, 1
        %s167 = scalar_lea.sflag [#allocation6], %s166
        %s168 = sand.u32 %s57, 1
        %s169 = smul.addr %s168, 16
        %s170 = scalar_lea.vmem [#allocation7], %s169
        // Predicated region
        $region29: #{tpu_custom_call.1} parent=23 // pred_check
          %p171 = pneg %p67
        $region30: #{tpu_custom_call.1} parent=23 // pred_check_branch
          %173 = sbr.rel (%p171) target = $region32
        $region31: #{tpu_custom_call.1} parent=23 // pred_region
          %s174 = smul.u32 2, %s23
          %s176 = ssub.s32 256, 256
          %177 = vsyncadd %s167, %s176
          %s178 = smul.addr %s174, 128
          %s179 = scalar_lea.hbm %s2, %s178
          %s180 = sshll.u32 %s170, 4
          %s181 = int_to_ptr.vmem [resolvable:$true] %s180
          %186 = dma.vmem_to_hbm [thread:$0]  %s181, 256, %s179, %s167, 128, 128, 8
        $region32: #{tpu_custom_call.1} parent=23 // pred_fallthru
          _
      $region24: #{tpu_custom_call.1} parent=5 // pred_fallthru
        _
      %p187 = scmp.le.s32.totalorder 2, %s18
      // Predicated region
      $region33: #{tpu_custom_call.1} parent=5 // pred_check
        %p188 = pneg %p187
      $region34: #{tpu_custom_call.1} parent=5 // pred_check_branch
        %190 = sbr.rel (%p188) target = $region36
      $region35: #{tpu_custom_call.1} parent=5 // pred_region
        %s191 = ssub.s32 %s18, 2
        // Predicated region
        $region37: #{tpu_custom_call.1} parent=35 // pred_check
          %p192 = pneg %p73
        $region38: #{tpu_custom_call.1} parent=35 // pred_check_branch
          %194 = sbr.rel (%p192) target = $region40
        $region39: #{tpu_custom_call.1} parent=35 // pred_region
          %s195 = sand.u32 %s58, 1
          %s196 = scalar_lea.sflag [#allocation6], %s195
          %s197 = sand.u32 %s58, 1
          %s198 = smul.addr %s197, 16
          %s199 = scalar_lea.vmem [#allocation7], %s198
          %200 = dma.done %s196, 256
        $region40: #{tpu_custom_call.1} parent=35 // pred_fallthru
          _
      $region36: #{tpu_custom_call.1} parent=5 // pred_fallthru
        _
    $region6: #{tpu_custom_call.1} parent=1 // loop_footer
      %s22 = sadd.s32 1, %s18
    $region7: #{tpu_custom_call.1} parent=1 // loop_footer_branch
      %17 = sbr.rel target = $region3
    $region8: #{tpu_custom_call.1} parent=1 // loop_exit
      _
    %201 = vsyncpa [#allocation5], 1
    %s202 = scalar_lea.sflag [#allocation5], 1
    %203 = vsyncpa %s202, 1
    %204 = vsyncpa [#allocation6], 1
    %s205 = scalar_lea.sflag [#allocation6], 1
    %206 = vsyncpa %s205, 1

</llo_original>
